<compile_context>
chip_gen: v5e
topology: v5e:2x2
jax: 0.10.0
libtpu: 0.0.40
codegen_flags: <defaults>
</compile_context>

<pallas_src>
import numpy as np
import jax
import jax.numpy as jnp
from jax.experimental import pallas as pl
from jax.experimental.pallas import tpu as pltpu

_LANE = 128


def _round_up(n, m=_LANE):
    return ((n + m - 1) // m) * m


def _pad_axis(a, axis, width):
    pad = width - a.shape[axis]
    if pad == 0:
        return a
    cfg = [(0, 0)] * a.ndim
    cfg[axis] = (0, pad)
    return jnp.pad(a, cfg)


def _rgcn3_fused_kernel(a_ref, x_ref, w1_ref, b1_ref, w2_ref, b2_ref, w3_ref, b3_ref,
                        o_ref):
    """conv1 -> relu -> conv2 -> relu -> conv3, all relations, single grid step."""
    num_rel = a_ref.shape[0]

    def hetero_layer(h, w_ref, b_ref, relu):
        # sum_r Â_r @ (h @ W_r) + sum_r b_r   (HeteroGraphConv aggregate='sum').
        # Per-relation 2D matmuls on static slices -> no concatenate / relayout.
        # The Â matmul uses bf16 operands with f32 accumulation; on v7x the MRB makes
        # the unrolled per-relation accumulation effectively free.
        y = None
        for r in range(num_rel):
            xw = jnp.dot(h, w_ref[r], preferred_element_type=jnp.float32)   # [N, Fout]
            t = jnp.dot(a_ref[r], xw.astype(a_ref.dtype),
                        preferred_element_type=jnp.float32)                 # [N, Fout]
            y = t if y is None else y + t
        y = y + b_ref[...]                                                   # [1, Fout] bcast
        return jnp.maximum(y, 0.0) if relu else y

    h = hetero_layer(x_ref[...].astype(jnp.float32), w1_ref, b1_ref, relu=True)
    h = hetero_layer(h, w2_ref, b2_ref, relu=True)
    o_ref[...] = hetero_layer(h, w3_ref, b3_ref, relu=False).astype(o_ref.dtype)


@jax.jit
def rgcn3conv_forward(a_norm, x, params):
    """RGCN3conv.forward for a single-node-type heterograph with R edge types.

    a_norm: [R, N, N]  normalized adjacencies (dst x src)
    x:      [N, Fin]
    params: w{1,2,3}: [R, Fin_l, Fout_l], b{1,2,3}: [R, 1, Fout_l]
    """
    R, N, _ = a_norm.shape
    hid = params["w1"].shape[2]
    hid2 = params["w2"].shape[2]
    out_feats = params["w3"].shape[2]
    hid_p, hid2_p, out_p = _round_up(hid), _round_up(hid2), _round_up(out_feats)

    # Â kept in its native [R, N, N] layout (no per-call transpose copy of the largest
    # operand) and narrowed to bf16 for the MXU; accumulation stays f32 in-kernel.
    a_bf16 = a_norm.astype(jnp.bfloat16)

    # Lane-dense feature dims: zero-pad hidden/output widths to 128. Padded columns of
    # h stay exactly zero (zero weight cols + zero bias cols + relu(0)=0), so results
    # are unchanged; output is sliced back after the call.
    w1 = _pad_axis(params["w1"], 2, hid_p)
    w2 = _pad_axis(_pad_axis(params["w2"], 1, hid_p), 2, hid2_p)
    w3 = _pad_axis(_pad_axis(params["w3"], 1, hid2_p), 2, out_p)
    # aggregate='sum' adds every relation's bias -> pre-sum once in the wrapper.
    b1 = _pad_axis(params["b1"].sum(axis=0), 1, hid_p)      # [1, hid_p]
    b2 = _pad_axis(params["b2"].sum(axis=0), 1, hid2_p)     # [1, hid2_p]
    b3 = _pad_axis(params["b3"].sum(axis=0), 1, out_p)      # [1, out_p]

    out_padded = pl.pallas_call(
        _rgcn3_fused_kernel,
        out_shape=jax.ShapeDtypeStruct((N, out_p), x.dtype),
        # grid=(): one invocation; every operand is a whole-array VMEM block.
        in_specs=[pl.BlockSpec(memory_space=pltpu.MemorySpace.VMEM)] * 8,
        out_specs=pl.BlockSpec(memory_space=pltpu.MemorySpace.VMEM),
        compiler_params=pltpu.CompilerParams(vmem_limit_bytes=32 * 1024 * 1024),
    )(a_bf16, x, w1, b1, w2, b2, w3, b3)
    return out_padded[:, :out_feats]


def normalize_adj(adj):
    """DGL GraphConv norm='both': D_in^{-1/2} A D_out^{-1/2}, degrees clamped >= 1."""
    out_deg = jnp.clip(adj.sum(axis=1), 1.0, None)   # [R, N_src]
    in_deg = jnp.clip(adj.sum(axis=2), 1.0, None)    # [R, N_dst]
    return adj * (in_deg ** -0.5)[:, :, None] * (out_deg ** -0.5)[:, None, :]


if __name__ == "__main__":
    key = jax.random.PRNGKey(0)
    N, R = 16, 3                       # 16 nodes, 3 relation types (rel_names)
    in_feats, hid_feats, out_feats = 8, 16, 8

    ks = jax.random.split(key, 8)

    # Synthetic heterograph: R edge types over a single node type, dense adjacency.
    adj = (jax.random.uniform(ks[0], (R, N, N)) < 0.3).astype(jnp.float32)
    a_norm = normalize_adj(adj)
    x = jax.random.normal(ks[1], (N, in_feats), jnp.float32)

    def glorot(k, shape):
        fan_in, fan_out = shape[-2], shape[-1]
        lim = float(np.sqrt(6.0 / (fan_in + fan_out)))
        return jax.random.uniform(k, shape, jnp.float32, -lim, lim)

    params = {
        "w1": glorot(ks[2], (R, in_feats, hid_feats)),
        "b1": 0.1 * jax.random.normal(ks[3], (R, 1, hid_feats), jnp.float32),
        "w2": glorot(ks[4], (R, hid_feats, 2 * hid_feats)),
        "b2": 0.1 * jax.random.normal(ks[5], (R, 1, 2 * hid_feats), jnp.float32),
        "w3": glorot(ks[6], (R, 2 * hid_feats, out_feats)),
        "b3": 0.1 * jax.random.normal(ks[7], (R, 1, out_feats), jnp.float32),
    }

    out = jax.block_until_ready(rgcn3conv_forward(a_norm, x, params))

    # Pure-JAX f32 reference of the same semantics for a correctness check.
    def ref_layer(a, h, w, b, relu):
        y = jnp.einsum("rds,sf,rfo->do", a, h, w) + b.sum(axis=(0, 1))
        return jnp.maximum(y, 0.0) if relu else y

    h_ref = ref_layer(a_norm, x, params["w1"], params["b1"], True)
    h_ref = ref_layer(a_norm, h_ref, params["w2"], params["b2"], True)
    ref = ref_layer(a_norm, h_ref, params["w3"], params["b3"], False)

    # Â (and the Â-matmul operands) run in bf16 -> tolerance loosened vs. the f32 ref.
    np.testing.assert_allclose(np.asarray(out), np.asarray(ref), rtol=5e-2, atol=5e-2)
    print("KERNEL_OK")
</pallas_src>

<mosaic_0001>
module attributes {stable_mosaic.version = 11 : i64} {
  func.func @_rgcn3_fused_kernel(%arg0: memref<3x16x16xbf16, #tpu.memory_space<vmem>>, %arg1: memref<16x8xf32, #tpu.memory_space<vmem>>, %arg2: memref<3x8x128xf32, #tpu.memory_space<vmem>>, %arg3: memref<1x128xf32, #tpu.memory_space<vmem>>, %arg4: memref<3x128x128xf32, #tpu.memory_space<vmem>>, %arg5: memref<1x128xf32, #tpu.memory_space<vmem>>, %arg6: memref<3x128x128xf32, #tpu.memory_space<vmem>>, %arg7: memref<1x128xf32, #tpu.memory_space<vmem>>, %arg8: memref<16x128xf32, #tpu.memory_space<vmem>>) attributes {dimension_semantics = [], scalar_prefetch = 0 : i64, scratch_operands = 0 : i64, tpu.core_type = #tpu.core_type<tc>} {
    %c0 = arith.constant 0 : index
    %c0_0 = arith.constant 0 : index
    %0 = vector.load %arg1[%c0, %c0_0] : memref<16x8xf32, #tpu.memory_space<vmem>>, vector<16x8xf32>
    %c0_1 = arith.constant 0 : index
    %c0_2 = arith.constant 0 : index
    %c0_3 = arith.constant 0 : index
    %1 = vector.load %arg2[%c0_1, %c0_2, %c0_3] : memref<3x8x128xf32, #tpu.memory_space<vmem>>, vector<1x8x128xf32>
    %2 = vector.shape_cast %1 : vector<1x8x128xf32> to vector<8x128xf32>
    %cst = arith.constant dense<0.000000e+00> : vector<16x128xf32>
    %3 = tpu.matmul %0, %2, %cst {dimension_numbers = #tpu.dot_dimension_numbers<[1], [0], [0], [1], [0, 0, 1, 1], [], []>} : vector<16x8xf32>, vector<8x128xf32>, vector<16x128xf32> -> vector<16x128xf32>
    %c0_4 = arith.constant 0 : index
    %c0_5 = arith.constant 0 : index
    %c0_6 = arith.constant 0 : index
    %4 = vector.load %arg0[%c0_4, %c0_5, %c0_6] : memref<3x16x16xbf16, #tpu.memory_space<vmem>>, vector<1x16x16xbf16>
    %5 = vector.shape_cast %4 : vector<1x16x16xbf16> to vector<16x16xbf16>
    %6 = arith.truncf %3 : vector<16x128xf32> to vector<16x128xbf16>
    %cst_7 = arith.constant dense<0.000000e+00> : vector<16x128xf32>
    %7 = tpu.matmul %5, %6, %cst_7 {dimension_numbers = #tpu.dot_dimension_numbers<[1], [0], [0], [1], [0, 0, 1, 1], [], []>} : vector<16x16xbf16>, vector<16x128xbf16>, vector<16x128xf32> -> vector<16x128xf32>
    %c1 = arith.constant 1 : index
    %c0_8 = arith.constant 0 : index
    %c0_9 = arith.constant 0 : index
    %8 = vector.load %arg2[%c1, %c0_8, %c0_9] : memref<3x8x128xf32, #tpu.memory_space<vmem>>, vector<1x8x128xf32>
    %9 = vector.shape_cast %8 : vector<1x8x128xf32> to vector<8x128xf32>
    %cst_10 = arith.constant dense<0.000000e+00> : vector<16x128xf32>
    %10 = tpu.matmul %0, %9, %cst_10 {dimension_numbers = #tpu.dot_dimension_numbers<[1], [0], [0], [1], [0, 0, 1, 1], [], []>} : vector<16x8xf32>, vector<8x128xf32>, vector<16x128xf32> -> vector<16x128xf32>
    %c1_11 = arith.constant 1 : index
    %c0_12 = arith.constant 0 : index
    %c0_13 = arith.constant 0 : index
    %11 = vector.load %arg0[%c1_11, %c0_12, %c0_13] : memref<3x16x16xbf16, #tpu.memory_space<vmem>>, vector<1x16x16xbf16>
    %12 = vector.shape_cast %11 : vector<1x16x16xbf16> to vector<16x16xbf16>
    %13 = arith.truncf %10 : vector<16x128xf32> to vector<16x128xbf16>
    %cst_14 = arith.constant dense<0.000000e+00> : vector<16x128xf32>
    %14 = tpu.matmul %12, %13, %cst_14 {dimension_numbers = #tpu.dot_dimension_numbers<[1], [0], [0], [1], [0, 0, 1, 1], [], []>} : vector<16x16xbf16>, vector<16x128xbf16>, vector<16x128xf32> -> vector<16x128xf32>
    %15 = arith.addf %7, %14 : vector<16x128xf32>
    %c2 = arith.constant 2 : index
    %c0_15 = arith.constant 0 : index
    %c0_16 = arith.constant 0 : index
    %16 = vector.load %arg2[%c2, %c0_15, %c0_16] : memref<3x8x128xf32, #tpu.memory_space<vmem>>, vector<1x8x128xf32>
    %17 = vector.shape_cast %16 : vector<1x8x128xf32> to vector<8x128xf32>
    %cst_17 = arith.constant dense<0.000000e+00> : vector<16x128xf32>
    %18 = tpu.matmul %0, %17, %cst_17 {dimension_numbers = #tpu.dot_dimension_numbers<[1], [0], [0], [1], [0, 0, 1, 1], [], []>} : vector<16x8xf32>, vector<8x128xf32>, vector<16x128xf32> -> vector<16x128xf32>
    %c2_18 = arith.constant 2 : index
    %c0_19 = arith.constant 0 : index
    %c0_20 = arith.constant 0 : index
    %19 = vector.load %arg0[%c2_18, %c0_19, %c0_20] : memref<3x16x16xbf16, #tpu.memory_space<vmem>>, vector<1x16x16xbf16>
    %20 = vector.shape_cast %19 : vector<1x16x16xbf16> to vector<16x16xbf16>
    %21 = arith.truncf %18 : vector<16x128xf32> to vector<16x128xbf16>
    %cst_21 = arith.constant dense<0.000000e+00> : vector<16x128xf32>
    %22 = tpu.matmul %20, %21, %cst_21 {dimension_numbers = #tpu.dot_dimension_numbers<[1], [0], [0], [1], [0, 0, 1, 1], [], []>} : vector<16x16xbf16>, vector<16x128xbf16>, vector<16x128xf32> -> vector<16x128xf32>
    %23 = arith.addf %15, %22 : vector<16x128xf32>
    %c0_22 = arith.constant 0 : index
    %c0_23 = arith.constant 0 : index
    %24 = vector.load %arg3[%c0_22, %c0_23] : memref<1x128xf32, #tpu.memory_space<vmem>>, vector<1x128xf32>
    %25 = vector.broadcast %24 : vector<1x128xf32> to vector<16x128xf32>
    %26 = arith.addf %23, %25 : vector<16x128xf32>
    %cst_24 = arith.constant 0.000000e+00 : f32
    %27 = vector.broadcast %cst_24 : f32 to vector<16x128xf32>
    %28 = arith.maximumf %26, %27 : vector<16x128xf32>
    %c0_25 = arith.constant 0 : index
    %c0_26 = arith.constant 0 : index
    %c0_27 = arith.constant 0 : index
    %29 = vector.load %arg4[%c0_25, %c0_26, %c0_27] : memref<3x128x128xf32, #tpu.memory_space<vmem>>, vector<1x128x128xf32>
    %30 = vector.shape_cast %29 : vector<1x128x128xf32> to vector<128x128xf32>
    %cst_28 = arith.constant dense<0.000000e+00> : vector<16x128xf32>
    %31 = tpu.matmul %28, %30, %cst_28 {dimension_numbers = #tpu.dot_dimension_numbers<[1], [0], [0], [1], [0, 0, 1, 1], [], []>} : vector<16x128xf32>, vector<128x128xf32>, vector<16x128xf32> -> vector<16x128xf32>
    %c0_29 = arith.constant 0 : index
    %c0_30 = arith.constant 0 : index
    %c0_31 = arith.constant 0 : index
    %32 = vector.load %arg0[%c0_29, %c0_30, %c0_31] : memref<3x16x16xbf16, #tpu.memory_space<vmem>>, vector<1x16x16xbf16>
    %33 = vector.shape_cast %32 : vector<1x16x16xbf16> to vector<16x16xbf16>
    %34 = arith.truncf %31 : vector<16x128xf32> to vector<16x128xbf16>
    %cst_32 = arith.constant dense<0.000000e+00> : vector<16x128xf32>
    %35 = tpu.matmul %33, %34, %cst_32 {dimension_numbers = #tpu.dot_dimension_numbers<[1], [0], [0], [1], [0, 0, 1, 1], [], []>} : vector<16x16xbf16>, vector<16x128xbf16>, vector<16x128xf32> -> vector<16x128xf32>
    %c1_33 = arith.constant 1 : index
    %c0_34 = arith.constant 0 : index
    %c0_35 = arith.constant 0 : index
    %36 = vector.load %arg4[%c1_33, %c0_34, %c0_35] : memref<3x128x128xf32, #tpu.memory_space<vmem>>, vector<1x128x128xf32>
    %37 = vector.shape_cast %36 : vector<1x128x128xf32> to vector<128x128xf32>
    %cst_36 = arith.constant dense<0.000000e+00> : vector<16x128xf32>
    %38 = tpu.matmul %28, %37, %cst_36 {dimension_numbers = #tpu.dot_dimension_numbers<[1], [0], [0], [1], [0, 0, 1, 1], [], []>} : vector<16x128xf32>, vector<128x128xf32>, vector<16x128xf32> -> vector<16x128xf32>
    %c1_37 = arith.constant 1 : index
    %c0_38 = arith.constant 0 : index
    %c0_39 = arith.constant 0 : index
    %39 = vector.load %arg0[%c1_37, %c0_38, %c0_39] : memref<3x16x16xbf16, #tpu.memory_space<vmem>>, vector<1x16x16xbf16>
    %40 = vector.shape_cast %39 : vector<1x16x16xbf16> to vector<16x16xbf16>
    %41 = arith.truncf %38 : vector<16x128xf32> to vector<16x128xbf16>
    %cst_40 = arith.constant dense<0.000000e+00> : vector<16x128xf32>
    %42 = tpu.matmul %40, %41, %cst_40 {dimension_numbers = #tpu.dot_dimension_numbers<[1], [0], [0], [1], [0, 0, 1, 1], [], []>} : vector<16x16xbf16>, vector<16x128xbf16>, vector<16x128xf32> -> vector<16x128xf32>
    %43 = arith.addf %35, %42 : vector<16x128xf32>
    %c2_41 = arith.constant 2 : index
    %c0_42 = arith.constant 0 : index
    %c0_43 = arith.constant 0 : index
    %44 = vector.load %arg4[%c2_41, %c0_42, %c0_43] : memref<3x128x128xf32, #tpu.memory_space<vmem>>, vector<1x128x128xf32>
    %45 = vector.shape_cast %44 : vector<1x128x128xf32> to vector<128x128xf32>
    %cst_44 = arith.constant dense<0.000000e+00> : vector<16x128xf32>
    %46 = tpu.matmul %28, %45, %cst_44 {dimension_numbers = #tpu.dot_dimension_numbers<[1], [0], [0], [1], [0, 0, 1, 1], [], []>} : vector<16x128xf32>, vector<128x128xf32>, vector<16x128xf32> -> vector<16x128xf32>
    %c2_45 = arith.constant 2 : index
    %c0_46 = arith.constant 0 : index
    %c0_47 = arith.constant 0 : index
    %47 = vector.load %arg0[%c2_45, %c0_46, %c0_47] : memref<3x16x16xbf16, #tpu.memory_space<vmem>>, vector<1x16x16xbf16>
    %48 = vector.shape_cast %47 : vector<1x16x16xbf16> to vector<16x16xbf16>
    %49 = arith.truncf %46 : vector<16x128xf32> to vector<16x128xbf16>
    %cst_48 = arith.constant dense<0.000000e+00> : vector<16x128xf32>
    %50 = tpu.matmul %48, %49, %cst_48 {dimension_numbers = #tpu.dot_dimension_numbers<[1], [0], [0], [1], [0, 0, 1, 1], [], []>} : vector<16x16xbf16>, vector<16x128xbf16>, vector<16x128xf32> -> vector<16x128xf32>
    %51 = arith.addf %43, %50 : vector<16x128xf32>
    %c0_49 = arith.constant 0 : index
    %c0_50 = arith.constant 0 : index
    %52 = vector.load %arg5[%c0_49, %c0_50] : memref<1x128xf32, #tpu.memory_space<vmem>>, vector<1x128xf32>
    %53 = vector.broadcast %52 : vector<1x128xf32> to vector<16x128xf32>
    %54 = arith.addf %51, %53 : vector<16x128xf32>
    %cst_51 = arith.constant 0.000000e+00 : f32
    %55 = vector.broadcast %cst_51 : f32 to vector<16x128xf32>
    %56 = arith.maximumf %54, %55 : vector<16x128xf32>
    %c0_52 = arith.constant 0 : index
    %c0_53 = arith.constant 0 : index
    %c0_54 = arith.constant 0 : index
    %57 = vector.load %arg6[%c0_52, %c0_53, %c0_54] : memref<3x128x128xf32, #tpu.memory_space<vmem>>, vector<1x128x128xf32>
    %58 = vector.shape_cast %57 : vector<1x128x128xf32> to vector<128x128xf32>
    %cst_55 = arith.constant dense<0.000000e+00> : vector<16x128xf32>
    %59 = tpu.matmul %56, %58, %cst_55 {dimension_numbers = #tpu.dot_dimension_numbers<[1], [0], [0], [1], [0, 0, 1, 1], [], []>} : vector<16x128xf32>, vector<128x128xf32>, vector<16x128xf32> -> vector<16x128xf32>
    %c0_56 = arith.constant 0 : index
    %c0_57 = arith.constant 0 : index
    %c0_58 = arith.constant 0 : index
    %60 = vector.load %arg0[%c0_56, %c0_57, %c0_58] : memref<3x16x16xbf16, #tpu.memory_space<vmem>>, vector<1x16x16xbf16>
    %61 = vector.shape_cast %60 : vector<1x16x16xbf16> to vector<16x16xbf16>
    %62 = arith.truncf %59 : vector<16x128xf32> to vector<16x128xbf16>
    %cst_59 = arith.constant dense<0.000000e+00> : vector<16x128xf32>
    %63 = tpu.matmul %61, %62, %cst_59 {dimension_numbers = #tpu.dot_dimension_numbers<[1], [0], [0], [1], [0, 0, 1, 1], [], []>} : vector<16x16xbf16>, vector<16x128xbf16>, vector<16x128xf32> -> vector<16x128xf32>
    %c1_60 = arith.constant 1 : index
    %c0_61 = arith.constant 0 : index
    %c0_62 = arith.constant 0 : index
    %64 = vector.load %arg6[%c1_60, %c0_61, %c0_62] : memref<3x128x128xf32, #tpu.memory_space<vmem>>, vector<1x128x128xf32>
    %65 = vector.shape_cast %64 : vector<1x128x128xf32> to vector<128x128xf32>
    %cst_63 = arith.constant dense<0.000000e+00> : vector<16x128xf32>
    %66 = tpu.matmul %56, %65, %cst_63 {dimension_numbers = #tpu.dot_dimension_numbers<[1], [0], [0], [1], [0, 0, 1, 1], [], []>} : vector<16x128xf32>, vector<128x128xf32>, vector<16x128xf32> -> vector<16x128xf32>
    %c1_64 = arith.constant 1 : index
    %c0_65 = arith.constant 0 : index
    %c0_66 = arith.constant 0 : index
    %67 = vector.load %arg0[%c1_64, %c0_65, %c0_66] : memref<3x16x16xbf16, #tpu.memory_space<vmem>>, vector<1x16x16xbf16>
    %68 = vector.shape_cast %67 : vector<1x16x16xbf16> to vector<16x16xbf16>
    %69 = arith.truncf %66 : vector<16x128xf32> to vector<16x128xbf16>
    %cst_67 = arith.constant dense<0.000000e+00> : vector<16x128xf32>
    %70 = tpu.matmul %68, %69, %cst_67 {dimension_numbers = #tpu.dot_dimension_numbers<[1], [0], [0], [1], [0, 0, 1, 1], [], []>} : vector<16x16xbf16>, vector<16x128xbf16>, vector<16x128xf32> -> vector<16x128xf32>
    %71 = arith.addf %63, %70 : vector<16x128xf32>
    %c2_68 = arith.constant 2 : index
    %c0_69 = arith.constant 0 : index
    %c0_70 = arith.constant 0 : index
    %72 = vector.load %arg6[%c2_68, %c0_69, %c0_70] : memref<3x128x128xf32, #tpu.memory_space<vmem>>, vector<1x128x128xf32>
    %73 = vector.shape_cast %72 : vector<1x128x128xf32> to vector<128x128xf32>
    %cst_71 = arith.constant dense<0.000000e+00> : vector<16x128xf32>
    %74 = tpu.matmul %56, %73, %cst_71 {dimension_numbers = #tpu.dot_dimension_numbers<[1], [0], [0], [1], [0, 0, 1, 1], [], []>} : vector<16x128xf32>, vector<128x128xf32>, vector<16x128xf32> -> vector<16x128xf32>
    %c2_72 = arith.constant 2 : index
    %c0_73 = arith.constant 0 : index
    %c0_74 = arith.constant 0 : index
    %75 = vector.load %arg0[%c2_72, %c0_73, %c0_74] : memref<3x16x16xbf16, #tpu.memory_space<vmem>>, vector<1x16x16xbf16>
    %76 = vector.shape_cast %75 : vector<1x16x16xbf16> to vector<16x16xbf16>
    %77 = arith.truncf %74 : vector<16x128xf32> to vector<16x128xbf16>
    %cst_75 = arith.constant dense<0.000000e+00> : vector<16x128xf32>
    %78 = tpu.matmul %76, %77, %cst_75 {dimension_numbers = #tpu.dot_dimension_numbers<[1], [0], [0], [1], [0, 0, 1, 1], [], []>} : vector<16x16xbf16>, vector<16x128xbf16>, vector<16x128xf32> -> vector<16x128xf32>
    %79 = arith.addf %71, %78 : vector<16x128xf32>
    %c0_76 = arith.constant 0 : index
    %c0_77 = arith.constant 0 : index
    %80 = vector.load %arg7[%c0_76, %c0_77] : memref<1x128xf32, #tpu.memory_space<vmem>>, vector<1x128xf32>
    %81 = vector.broadcast %80 : vector<1x128xf32> to vector<16x128xf32>
    %82 = arith.addf %79, %81 : vector<16x128xf32>
    %c0_78 = arith.constant 0 : index
    %c0_79 = arith.constant 0 : index
    %83 = vector.load %arg8[%c0_78, %c0_79] : memref<16x128xf32, #tpu.memory_space<vmem>>, vector<16x128xf32>
    tpu.vector_store %arg8[%c0_78, %c0_79], %82 {strides = array<i32>} : memref<16x128xf32, #tpu.memory_space<vmem>>, vector<16x128xf32>,
    return
  }
}

</mosaic_0001>

<llo_original>
// kernel: rgcn3conv_forward.1
$region0: #{rgcn3conv_forward.1}
  #allocation0 [shape = 'u32[]', space=smem, size = 0x4, offset = 0x4, fixed_abs, tag = 'smem constant byte address 0x4 - core index']
  #allocation1 [shape = 'u32[72,128]{1,0:T(1,128)}', space=vmem, size = 0x9000, scoped, tag = 'internal scratch']
  %s0 = inlined_call_operand.vmem [shape: bf16[3,16,16], index: 0, kind: input, shape index: {}]
  %s1 = inlined_call_operand.vmem [shape: f32[16,8], index: 1, kind: input, shape index: {}]
  %s2 = inlined_call_operand.vmem [shape: f32[3,8,128], index: 2, kind: input, shape index: {}]
  %s3 = inlined_call_operand.vmem [shape: f32[1,128], index: 3, kind: input, shape index: {}]
  %s4 = inlined_call_operand.vmem [shape: f32[3,128,128], index: 4, kind: input, shape index: {}]
  %s5 = inlined_call_operand.vmem [shape: f32[1,128], index: 5, kind: input, shape index: {}]
  %s6 = inlined_call_operand.vmem [shape: f32[3,128,128], index: 6, kind: input, shape index: {}]
  %s7 = inlined_call_operand.vmem [shape: f32[1,128], index: 7, kind: input, shape index: {}]
  %s8 = inlined_call_operand.vmem [shape: f32[16,128], index: 8, kind: output, shape index: {}]
  %s9 = sld [smem:[#allocation0]]
  $region42: #{rgcn3conv_forward.1} parent=0
    _
  %s11 = ssub.s32 1, %s9
  %s12 = scalar_select 0, %s11, %s9
  // Predicated region
  $region2: #{rgcn3conv_forward.1} parent=0 // pred_check
    _
  $region3: #{rgcn3conv_forward.1} parent=0 // pred_check_branch
    %14 = sbr.rel (0) target = $region5
  $region4: #{rgcn3conv_forward.1} parent=0 // pred_region
    _
  $region5: #{rgcn3conv_forward.1} parent=0 // pred_fallthru
    _
  // Predicated region
  $region6: #{rgcn3conv_forward.1} parent=0 // pred_check
    _
  $region7: #{rgcn3conv_forward.1} parent=0 // pred_check_branch
    %16 = sbr.rel (0) target = $region9
  $region8: #{rgcn3conv_forward.1} parent=0 // pred_region
    _
  $region9: #{rgcn3conv_forward.1} parent=0 // pred_fallthru
    _
  // Predicated region
  $region10: #{rgcn3conv_forward.1} parent=0 // pred_check
    _
  $region11: #{rgcn3conv_forward.1} parent=0 // pred_check_branch
    %18 = sbr.rel (0) target = $region13
  $region12: #{rgcn3conv_forward.1} parent=0 // pred_region
    _
  $region13: #{rgcn3conv_forward.1} parent=0 // pred_fallthru
    _
  // Predicated region
  $region14: #{rgcn3conv_forward.1} parent=0 // pred_check
    _
  $region15: #{rgcn3conv_forward.1} parent=0 // pred_check_branch
    %20 = sbr.rel (0) target = $region17
  $region16: #{rgcn3conv_forward.1} parent=0 // pred_region
    _
  $region17: #{rgcn3conv_forward.1} parent=0 // pred_fallthru
    _
  // Predicated region
  $region18: #{rgcn3conv_forward.1} parent=0 // pred_check
    _
  $region19: #{rgcn3conv_forward.1} parent=0 // pred_check_branch
    %22 = sbr.rel (0) target = $region21
  $region20: #{rgcn3conv_forward.1} parent=0 // pred_region
    _
  $region21: #{rgcn3conv_forward.1} parent=0 // pred_fallthru
    _
  // Predicated region
  $region22: #{rgcn3conv_forward.1} parent=0 // pred_check
    _
  $region23: #{rgcn3conv_forward.1} parent=0 // pred_check_branch
    %24 = sbr.rel (0) target = $region25
  $region24: #{rgcn3conv_forward.1} parent=0 // pred_region
    _
  $region25: #{rgcn3conv_forward.1} parent=0 // pred_fallthru
    _
  // Predicated region
  $region26: #{rgcn3conv_forward.1} parent=0 // pred_check
    _
  $region27: #{rgcn3conv_forward.1} parent=0 // pred_check_branch
    %26 = sbr.rel (0) target = $region29
  $region28: #{rgcn3conv_forward.1} parent=0 // pred_region
    _
  $region29: #{rgcn3conv_forward.1} parent=0 // pred_fallthru
    _
  // Predicated region
  $region30: #{rgcn3conv_forward.1} parent=0 // pred_check
    _
  $region31: #{rgcn3conv_forward.1} parent=0 // pred_check_branch
    %28 = sbr.rel (0) target = $region33
  $region32: #{rgcn3conv_forward.1} parent=0 // pred_region
    _
  $region33: #{rgcn3conv_forward.1} parent=0 // pred_fallthru
    _
  %v30 = vld [vmem:[%s1] sm:$0xff]
  %v31 = vld [vmem:[%s1 + $0x8] sm:$0xff]
  %v32 = vld [vmem:[%s2] sm:$0xff]
  %vm33 = vcmask 64512
  %v35 = vsel %vm33, %v30, 0
  %v38 = vsel %vm33, %v31, 0
  %40 = vmatpush.msra.mxu0 0.0
  %41 = vmatpush.msra.mxu0 0.0
  %42 = vmatpush.msra.mxu0 0.0
  %43 = vmatpush.msra.mxu0 0.0
  %44 = vmatpush.msra.mxu0 0.0
  %45 = vmatpush.msra.mxu0 0.0
  %46 = vmatpush.msra.mxu0 0.0
  %47 = vmatpush.msra.mxu0 0.0
  %48 = vmatpush.msra.mxu0 0.0
  %49 = vmatpush.msra.mxu0 0.0
  %50 = vmatpush.msra.mxu0 0.0
  %51 = vmatpush.msra.mxu0 0.0
  %52 = vmatpush.msra.mxu0 0.0
  %53 = vmatpush.msra.mxu0 0.0
  %54 = vmatpush.msra.mxu0 0.0
  %55 = vmatpush.msra.mxu0 %v32
  %56 = vmatmul.f32.gmra.mxu0 %v35
  %v57 = vpop.f32.mrf.mxu0
  %v58 = vadd.f32 0.0, %v57
  %59 = vmatmul.f32.gmra.mxu0 %v38
  %v60 = vpop.f32.mrf.mxu0
  %v61 = vadd.f32 0.0, %v60
  %62 = vdwg.mxu0
  %v63 = vld [vmem:[%s0] sm:$0xf]
  %v64 = vld [vmem:[%s0 + $0x4] sm:$0xf]
  %v65 = vpack.c.bf16 %v61, %v58
  %s66 = scalar_lea.vmem %s2, 8
  %v67 = vld [vmem:[%s66] sm:$0xff]
  %68 = vmatpush.msra.mxu0 0.0
  %69 = vmatpush.msra.mxu0 0.0
  %70 = vmatpush.msra.mxu0 0.0
  %71 = vmatpush.msra.mxu0 0.0
  %72 = vmatpush.msra.mxu0 0.0
  %73 = vmatpush.msra.mxu0 0.0
  %74 = vmatpush.msra.mxu0 0.0
  %75 = vmatpush.msra.mxu0 0.0
  %76 = vmatpush.msra.mxu0 0.0
  %77 = vmatpush.msra.mxu0 0.0
  %78 = vmatpush.msra.mxu0 0.0
  %79 = vmatpush.msra.mxu0 0.0
  %80 = vmatpush.msra.mxu0 0.0
  %81 = vmatpush.msra.mxu0 0.0
  %82 = vmatpush.msra.mxu0 0.0
  %83 = vmatpush.msra.mxu0 %v67
  %84 = vmatmul.f32.gmra.mxu0 %v35
  %v85 = vpop.f32.mrf.mxu0
  %v86 = vadd.f32 0.0, %v85
  %87 = vmatmul.f32.gmra.mxu0 %v38
  %v88 = vpop.f32.mrf.mxu0
  %v89 = vadd.f32 0.0, %v88
  %90 = vdwg.mxu0
  %s91 = scalar_lea.vmem %s0, 8
  %v92 = vld [vmem:[%s91] sm:$0xf]
  %v93 = vld [vmem:[%s91 + $0x4] sm:$0xf]
  %v94 = vpack.c.bf16 %v89, %v86
  %v97 = vunpack.c.l.b16 %v92
  %v98 = vunpack.c.l.b16 %v93
  %v99 = vpack.c.b16 %v98, %v97
  %vm100 = vcmask 130048
  %v102 = vsel %vm100, %v99, 0
  %104 = vmatpush.bf16.msra.mxu0 0
  %105 = vmatpush.bf16.msra.mxu0 0
  %106 = vmatpush.bf16.msra.mxu0 0
  %107 = vmatpush.bf16.msra.mxu0 0
  %108 = vmatpush.bf16.msra.mxu0 0
  %109 = vmatpush.bf16.msra.mxu0 0
  %110 = vmatpush.bf16.msra.mxu0 0
  %111 = vmatpush.bf16.msra.mxu0 %v94
  %112 = vmatmul.bf16.gmra.mxu0 %v102
  %v113 = vpop.f32.mrf.mxu0
  %v114 = vadd.f32 0.0, %v113
  %v115 = vpop.f32.mrf.mxu0
  %v116 = vadd.f32 0.0, %v115
  %117 = vdwg.mxu0
  %v120 = vunpack.c.l.b16 %v63
  %v121 = vunpack.c.l.b16 %v64
  %v122 = vpack.c.b16 %v121, %v120
  %v124 = vsel %vm100, %v122, 0
  %126 = vmatpush.bf16.msra.mxu0 0
  %127 = vmatpush.bf16.msra.mxu0 0
  %128 = vmatpush.bf16.msra.mxu0 0
  %129 = vmatpush.bf16.msra.mxu0 0
  %130 = vmatpush.bf16.msra.mxu0 0
  %131 = vmatpush.bf16.msra.mxu0 0
  %132 = vmatpush.bf16.msra.mxu0 0
  %133 = vmatpush.bf16.msra.mxu0 %v65
  %134 = vmatmul.bf16.gmra.mxu0 %v124
  %v135 = vpop.f32.mrf.mxu0
  %v136 = vadd.f32 %v114, %v135
  %v137 = vpop.f32.mrf.mxu0
  %v138 = vadd.f32 %v116, %v137
  %139 = vdwg.mxu0
  %s140 = scalar_lea.vmem %s2, 16
  %v141 = vld [vmem:[%s140] sm:$0xff]
  %142 = vmatpush.msra.mxu0 0.0
  %143 = vmatpush.msra.mxu0 0.0
  %144 = vmatpush.msra.mxu0 0.0
  %145 = vmatpush.msra.mxu0 0.0
  %146 = vmatpush.msra.mxu0 0.0
  %147 = vmatpush.msra.mxu0 0.0
  %148 = vmatpush.msra.mxu0 0.0
  %149 = vmatpush.msra.mxu0 0.0
  %150 = vmatpush.msra.mxu0 0.0
  %151 = vmatpush.msra.mxu0 0.0
  %152 = vmatpush.msra.mxu0 0.0
  %153 = vmatpush.msra.mxu0 0.0
  %154 = vmatpush.msra.mxu0 0.0
  %155 = vmatpush.msra.mxu0 0.0
  %156 = vmatpush.msra.mxu0 0.0
  %157 = vmatpush.msra.mxu0 %v141
  %158 = vmatmul.f32.gmra.mxu0 %v35
  %v159 = vpop.f32.mrf.mxu0
  %v160 = vadd.f32 0.0, %v159
  %161 = vmatmul.f32.gmra.mxu0 %v38
  %v162 = vpop.f32.mrf.mxu0
  %v163 = vadd.f32 0.0, %v162
  %164 = vdwg.mxu0
  %s165 = scalar_lea.vmem %s0, 16
  %v166 = vld [vmem:[%s165] sm:$0xf]
  %v167 = vld [vmem:[%s165 + $0x4] sm:$0xf]
  %v168 = vpack.c.bf16 %v163, %v160
  %v171 = vunpack.c.l.b16 %v166
  %v172 = vunpack.c.l.b16 %v167
  %v173 = vpack.c.b16 %v172, %v171
  %v175 = vsel %vm100, %v173, 0
  %177 = vmatpush.bf16.msra.mxu0 0
  %178 = vmatpush.bf16.msra.mxu0 0
  %179 = vmatpush.bf16.msra.mxu0 0
  %180 = vmatpush.bf16.msra.mxu0 0
  %181 = vmatpush.bf16.msra.mxu0 0
  %182 = vmatpush.bf16.msra.mxu0 0
  %183 = vmatpush.bf16.msra.mxu0 0
  %184 = vmatpush.bf16.msra.mxu0 %v168
  %185 = vmatmul.bf16.gmra.mxu0 %v175
  %v186 = vpop.f32.mrf.mxu0
  %v187 = vadd.f32 0.0, %v186
  %v188 = vpop.f32.mrf.mxu0
  %v189 = vadd.f32 0.0, %v188
  %190 = vdwg.mxu0
  %v191 = vadd.f32 %v136, %v187
  %v192 = vadd.f32 %v138, %v189
  %v193 = vld [vmem:[%s3] sm:$0x1]
  %v195 = vperm.slane %v193, 0
  %v197 = vadd.f32 %v191, %v195
  %v198 = vadd.f32 %v192, %v195
  %v199 = vmax.f32 %v197, 0.0
  %v200 = vmax.f32 %v198, 0.0
  %v201 = vld [vmem:[%s4] sm:$0xff]
  %v202 = vld [vmem:[%s4 + $0x8] sm:$0xff]
  %v203 = vld [vmem:[%s4 + $0x10] sm:$0xff]
  %v204 = vld [vmem:[%s4 + $0x18] sm:$0xff]
  %v205 = vld [vmem:[%s4 + $0x20] sm:$0xff]
  %v206 = vld [vmem:[%s4 + $0x28] sm:$0xff]
  %v207 = vld [vmem:[%s4 + $0x30] sm:$0xff]
  %v208 = vld [vmem:[%s4 + $0x38] sm:$0xff]
  %v209 = vld [vmem:[%s4 + $0x40] sm:$0xff]
  %v210 = vld [vmem:[%s4 + $0x48] sm:$0xff]
  %v211 = vld [vmem:[%s4 + $0x50] sm:$0xff]
  %v212 = vld [vmem:[%s4 + $0x58] sm:$0xff]
  %v213 = vld [vmem:[%s4 + $0x60] sm:$0xff]
  %v214 = vld [vmem:[%s4 + $0x68] sm:$0xff]
  %v215 = vld [vmem:[%s4 + $0x70] sm:$0xff]
  %v216 = vld [vmem:[%s4 + $0x78] sm:$0xff]
  %217 = vmatpush.msra.mxu0 %v216
  %218 = vmatpush.msra.mxu0 %v215
  %219 = vmatpush.msra.mxu0 %v214
  %220 = vmatpush.msra.mxu0 %v213
  %221 = vmatpush.msra.mxu0 %v212
  %222 = vmatpush.msra.mxu0 %v211
  %223 = vmatpush.msra.mxu0 %v210
  %224 = vmatpush.msra.mxu0 %v209
  %225 = vmatpush.msra.mxu0 %v208
  %226 = vmatpush.msra.mxu0 %v207
  %227 = vmatpush.msra.mxu0 %v206
  %228 = vmatpush.msra.mxu0 %v205
  %229 = vmatpush.msra.mxu0 %v204
  %230 = vmatpush.msra.mxu0 %v203
  %231 = vmatpush.msra.mxu0 %v202
  %232 = vmatpush.msra.mxu0 %v201
  %233 = vmatmul.f32.gmra.mxu0 %v199
  %v234 = vpop.f32.mrf.mxu0
  %v235 = vadd.f32 0.0, %v234
  %236 = vmatmul.f32.gmra.mxu0 %v200
  %v237 = vpop.f32.mrf.mxu0
  %v238 = vadd.f32 0.0, %v237
  %239 = vdwg.mxu0
  %v240 = vpack.c.bf16 %v238, %v235
  %s241 = scalar_lea.vmem %s4, 128
  %v242 = vld [vmem:[%s241] sm:$0xff]
  %v243 = vld [vmem:[%s241 + $0x8] sm:$0xff]
  %v244 = vld [vmem:[%s241 + $0x10] sm:$0xff]
  %v245 = vld [vmem:[%s241 + $0x18] sm:$0xff]
  %v246 = vld [vmem:[%s241 + $0x20] sm:$0xff]
  %v247 = vld [vmem:[%s241 + $0x28] sm:$0xff]
  %v248 = vld [vmem:[%s241 + $0x30] sm:$0xff]
  %v249 = vld [vmem:[%s241 + $0x38] sm:$0xff]
  %v250 = vld [vmem:[%s241 + $0x40] sm:$0xff]
  %v251 = vld [vmem:[%s241 + $0x48] sm:$0xff]
  %v252 = vld [vmem:[%s241 + $0x50] sm:$0xff]
  %v253 = vld [vmem:[%s241 + $0x58] sm:$0xff]
  %v254 = vld [vmem:[%s241 + $0x60] sm:$0xff]
  %v255 = vld [vmem:[%s241 + $0x68] sm:$0xff]
  %v256 = vld [vmem:[%s241 + $0x70] sm:$0xff]
  %v257 = vld [vmem:[%s241 + $0x78] sm:$0xff]
  %258 = vmatpush.msra.mxu0 %v257
  %259 = vmatpush.msra.mxu0 %v256
  %260 = vmatpush.msra.mxu0 %v255
  %261 = vmatpush.msra.mxu0 %v254
  %262 = vmatpush.msra.mxu0 %v253
  %263 = vmatpush.msra.mxu0 %v252
  %264 = vmatpush.msra.mxu0 %v251
  %265 = vmatpush.msra.mxu0 %v250
  %266 = vmatpush.msra.mxu0 %v249
  %267 = vmatpush.msra.mxu0 %v248
  %268 = vmatpush.msra.mxu0 %v247
  %269 = vmatpush.msra.mxu0 %v246
  %270 = vmatpush.msra.mxu0 %v245
  %271 = vmatpush.msra.mxu0 %v244
  %272 = vmatpush.msra.mxu0 %v243
  %273 = vmatpush.msra.mxu0 %v242
  %274 = vmatmul.f32.gmra.mxu0 %v199
  %v275 = vpop.f32.mrf.mxu0
  %v276 = vadd.f32 0.0, %v275
  %277 = vmatmul.f32.gmra.mxu0 %v200
  %v278 = vpop.f32.mrf.mxu0
  %v279 = vadd.f32 0.0, %v278
  %280 = vdwg.mxu0
  %v281 = vpack.c.bf16 %v279, %v276
  %282 = vmatpush.bf16.msra.mxu0 0
  %283 = vmatpush.bf16.msra.mxu0 0
  %284 = vmatpush.bf16.msra.mxu0 0
  %285 = vmatpush.bf16.msra.mxu0 0
  %286 = vmatpush.bf16.msra.mxu0 0
  %287 = vmatpush.bf16.msra.mxu0 0
  %288 = vmatpush.bf16.msra.mxu0 0
  %289 = vmatpush.bf16.msra.mxu0 %v281
  %290 = vmatmul.bf16.gmra.mxu0 %v102
  %v291 = vpop.f32.mrf.mxu0
  %v292 = vadd.f32 0.0, %v291
  %v293 = vpop.f32.mrf.mxu0
  %v294 = vadd.f32 0.0, %v293
  %295 = vdwg.mxu0
  %296 = vmatpush.bf16.msra.mxu0 0
  %297 = vmatpush.bf16.msra.mxu0 0
  %298 = vmatpush.bf16.msra.mxu0 0
  %299 = vmatpush.bf16.msra.mxu0 0
  %300 = vmatpush.bf16.msra.mxu0 0
  %301 = vmatpush.bf16.msra.mxu0 0
  %302 = vmatpush.bf16.msra.mxu0 0
  %303 = vmatpush.bf16.msra.mxu0 %v240
  %304 = vmatmul.bf16.gmra.mxu0 %v124
  %v305 = vpop.f32.mrf.mxu0
  %v306 = vadd.f32 %v292, %v305
  %v307 = vpop.f32.mrf.mxu0
  %v308 = vadd.f32 %v294, %v307
  %309 = vdwg.mxu0
  %s310 = scalar_lea.vmem %s4, 256
  %v311 = vld [vmem:[%s310] sm:$0xff]
  %v312 = vld [vmem:[%s310 + $0x8] sm:$0xff]
  %v313 = vld [vmem:[%s310 + $0x10] sm:$0xff]
  %v314 = vld [vmem:[%s310 + $0x18] sm:$0xff]
  %v315 = vld [vmem:[%s310 + $0x20] sm:$0xff]
  %v316 = vld [vmem:[%s310 + $0x28] sm:$0xff]
  %v317 = vld [vmem:[%s310 + $0x30] sm:$0xff]
  %v318 = vld [vmem:[%s310 + $0x38] sm:$0xff]
  %v319 = vld [vmem:[%s310 + $0x40] sm:$0xff]
  %v320 = vld [vmem:[%s310 + $0x48] sm:$0xff]
  %v321 = vld [vmem:[%s310 + $0x50] sm:$0xff]
  %v322 = vld [vmem:[%s310 + $0x58] sm:$0xff]
  %v323 = vld [vmem:[%s310 + $0x60] sm:$0xff]
  %v324 = vld [vmem:[%s310 + $0x68] sm:$0xff]
  %v325 = vld [vmem:[%s310 + $0x70] sm:$0xff]
  %v326 = vld [vmem:[%s310 + $0x78] sm:$0xff]
  %327 = vmatpush.msra.mxu0 %v326
  %328 = vmatpush.msra.mxu0 %v325
  %329 = vmatpush.msra.mxu0 %v324
  %330 = vmatpush.msra.mxu0 %v323
  %331 = vmatpush.msra.mxu0 %v322
  %332 = vmatpush.msra.mxu0 %v321
  %333 = vmatpush.msra.mxu0 %v320
  %334 = vmatpush.msra.mxu0 %v319
  %335 = vmatpush.msra.mxu0 %v318
  %336 = vmatpush.msra.mxu0 %v317
  %337 = vmatpush.msra.mxu0 %v316
  %338 = vmatpush.msra.mxu0 %v315
  %339 = vmatpush.msra.mxu0 %v314
  %340 = vmatpush.msra.mxu0 %v313
  %341 = vmatpush.msra.mxu0 %v312
  %342 = vmatpush.msra.mxu0 %v311
  %343 = vmatmul.f32.gmra.mxu0 %v199
  %v344 = vpop.f32.mrf.mxu0
  %v345 = vadd.f32 0.0, %v344
  %346 = vmatmul.f32.gmra.mxu0 %v200
  %v347 = vpop.f32.mrf.mxu0
  %v348 = vadd.f32 0.0, %v347
  %349 = vdwg.mxu0
  %v350 = vpack.c.bf16 %v348, %v345
  %351 = vmatpush.bf16.msra.mxu0 0
  %352 = vmatpush.bf16.msra.mxu0 0
  %353 = vmatpush.bf16.msra.mxu0 0
  %354 = vmatpush.bf16.msra.mxu0 0
  %355 = vmatpush.bf16.msra.mxu0 0
  %356 = vmatpush.bf16.msra.mxu0 0
  %357 = vmatpush.bf16.msra.mxu0 0
  %358 = vmatpush.bf16.msra.mxu0 %v350
  %359 = vmatmul.bf16.gmra.mxu0 %v175
  %v360 = vpop.f32.mrf.mxu0
  %v361 = vadd.f32 0.0, %v360
  %v362 = vpop.f32.mrf.mxu0
  %v363 = vadd.f32 0.0, %v362
  %364 = vdwg.mxu0
  %v365 = vadd.f32 %v306, %v361
  %v366 = vadd.f32 %v308, %v363
  %v367 = vld [vmem:[%s5] sm:$0x1]
  %v369 = vperm.slane %v367, 0
  %v371 = vadd.f32 %v365, %v369
  %v372 = vadd.f32 %v366, %v369
  %v373 = vmax.f32 %v371, 0.0
  %v374 = vmax.f32 %v372, 0.0
  %v375 = vld [vmem:[%s6] sm:$0xff]
  %v376 = vld [vmem:[%s6 + $0x8] sm:$0xff]
  %v377 = vld [vmem:[%s6 + $0x10] sm:$0xff]
  %v378 = vld [vmem:[%s6 + $0x18] sm:$0xff]
  %v379 = vld [vmem:[%s6 + $0x20] sm:$0xff]
  %v380 = vld [vmem:[%s6 + $0x28] sm:$0xff]
  %v381 = vld [vmem:[%s6 + $0x30] sm:$0xff]
  %v382 = vld [vmem:[%s6 + $0x38] sm:$0xff]
  %v383 = vld [vmem:[%s6 + $0x40] sm:$0xff]
  %v384 = vld [vmem:[%s6 + $0x48] sm:$0xff]
  %v385 = vld [vmem:[%s6 + $0x50] sm:$0xff]
  %v386 = vld [vmem:[%s6 + $0x58] sm:$0xff]
  %v387 = vld [vmem:[%s6 + $0x60] sm:$0xff]
  %v388 = vld [vmem:[%s6 + $0x68] sm:$0xff]
  %v389 = vld [vmem:[%s6 + $0x70] sm:$0xff]
  %v390 = vld [vmem:[%s6 + $0x78] sm:$0xff]
  %391 = vmatpush.msra.mxu0 %v390
  %392 = vmatpush.msra.mxu0 %v389
  %393 = vmatpush.msra.mxu0 %v388
  %394 = vmatpush.msra.mxu0 %v387
  %395 = vmatpush.msra.mxu0 %v386
  %396 = vmatpush.msra.mxu0 %v385
  %397 = vmatpush.msra.mxu0 %v384
  %398 = vmatpush.msra.mxu0 %v383
  %399 = vmatpush.msra.mxu0 %v382
  %400 = vmatpush.msra.mxu0 %v381
  %401 = vmatpush.msra.mxu0 %v380
  %402 = vmatpush.msra.mxu0 %v379
  %403 = vmatpush.msra.mxu0 %v378
  %404 = vmatpush.msra.mxu0 %v377
  %405 = vmatpush.msra.mxu0 %v376
  %406 = vmatpush.msra.mxu0 %v375
  %407 = vmatmul.f32.gmra.mxu0 %v373
  %v408 = vpop.f32.mrf.mxu0
  %v409 = vadd.f32 0.0, %v408
  %410 = vmatmul.f32.gmra.mxu0 %v374
  %v411 = vpop.f32.mrf.mxu0
  %v412 = vadd.f32 0.0, %v411
  %413 = vdwg.mxu0
  %v414 = vpack.c.bf16 %v412, %v409
  %s415 = scalar_lea.vmem %s6, 128
  %v416 = vld [vmem:[%s415] sm:$0xff]
  %v417 = vld [vmem:[%s415 + $0x8] sm:$0xff]
  %v418 = vld [vmem:[%s415 + $0x10] sm:$0xff]
  %v419 = vld [vmem:[%s415 + $0x18] sm:$0xff]
  %v420 = vld [vmem:[%s415 + $0x20] sm:$0xff]
  %v421 = vld [vmem:[%s415 + $0x28] sm:$0xff]
  %v422 = vld [vmem:[%s415 + $0x30] sm:$0xff]
  %v423 = vld [vmem:[%s415 + $0x38] sm:$0xff]
  %v424 = vld [vmem:[%s415 + $0x40] sm:$0xff]
  %v425 = vld [vmem:[%s415 + $0x48] sm:$0xff]
  %v426 = vld [vmem:[%s415 + $0x50] sm:$0xff]
  %v427 = vld [vmem:[%s415 + $0x58] sm:$0xff]
  %v428 = vld [vmem:[%s415 + $0x60] sm:$0xff]
  %v429 = vld [vmem:[%s415 + $0x68] sm:$0xff]
  %v430 = vld [vmem:[%s415 + $0x70] sm:$0xff]
  %v431 = vld [vmem:[%s415 + $0x78] sm:$0xff]
  %432 = vmatpush.msra.mxu0 %v431
  %433 = vmatpush.msra.mxu0 %v430
  %434 = vmatpush.msra.mxu0 %v429
  %435 = vmatpush.msra.mxu0 %v428
  %436 = vmatpush.msra.mxu0 %v427
  %437 = vmatpush.msra.mxu0 %v426
  %438 = vmatpush.msra.mxu0 %v425
  %439 = vmatpush.msra.mxu0 %v424
  %440 = vmatpush.msra.mxu0 %v423
  %441 = vmatpush.msra.mxu0 %v422
  %442 = vmatpush.msra.mxu0 %v421
  %443 = vmatpush.msra.mxu0 %v420
  %444 = vmatpush.msra.mxu0 %v419
  %445 = vmatpush.msra.mxu0 %v418
  %446 = vmatpush.msra.mxu0 %v417
  %447 = vmatpush.msra.mxu0 %v416
  %448 = vmatmul.f32.gmra.mxu0 %v373
  %v449 = vpop.f32.mrf.mxu0
  %v450 = vadd.f32 0.0, %v449
  %451 = vmatmul.f32.gmra.mxu0 %v374
  %v452 = vpop.f32.mrf.mxu0
  %v453 = vadd.f32 0.0, %v452
  %454 = vdwg.mxu0
  %v455 = vpack.c.bf16 %v453, %v450
  %456 = vmatpush.bf16.msra.mxu0 0
  %457 = vmatpush.bf16.msra.mxu0 0
  %458 = vmatpush.bf16.msra.mxu0 0
  %459 = vmatpush.bf16.msra.mxu0 0
  %460 = vmatpush.bf16.msra.mxu0 0
  %461 = vmatpush.bf16.msra.mxu0 0
  %462 = vmatpush.bf16.msra.mxu0 0
  %463 = vmatpush.bf16.msra.mxu0 %v455
  %464 = vmatmul.bf16.gmra.mxu0 %v102
  %v465 = vpop.f32.mrf.mxu0
  %v466 = vadd.f32 0.0, %v465
  %v467 = vpop.f32.mrf.mxu0
  %v468 = vadd.f32 0.0, %v467
  %469 = vdwg.mxu0
  %470 = vmatpush.bf16.msra.mxu0 0
  %471 = vmatpush.bf16.msra.mxu0 0
  %472 = vmatpush.bf16.msra.mxu0 0
  %473 = vmatpush.bf16.msra.mxu0 0
  %474 = vmatpush.bf16.msra.mxu0 0
  %475 = vmatpush.bf16.msra.mxu0 0
  %476 = vmatpush.bf16.msra.mxu0 0
  %477 = vmatpush.bf16.msra.mxu0 %v414
  %478 = vmatmul.bf16.gmra.mxu0 %v124
  %v479 = vpop.f32.mrf.mxu0
  %v480 = vadd.f32 %v466, %v479
  %v481 = vpop.f32.mrf.mxu0
  %v482 = vadd.f32 %v468, %v481
  %483 = vdwg.mxu0
  %s484 = scalar_lea.vmem %s6, 256
  %v485 = vld [vmem:[%s484] sm:$0xff]
  %v486 = vld [vmem:[%s484 + $0x8] sm:$0xff]
  %v487 = vld [vmem:[%s484 + $0x10] sm:$0xff]
  %v488 = vld [vmem:[%s484 + $0x18] sm:$0xff]
  %v489 = vld [vmem:[%s484 + $0x20] sm:$0xff]
  %v490 = vld [vmem:[%s484 + $0x28] sm:$0xff]
  %v491 = vld [vmem:[%s484 + $0x30] sm:$0xff]
  %v492 = vld [vmem:[%s484 + $0x38] sm:$0xff]
  %v493 = vld [vmem:[%s484 + $0x40] sm:$0xff]
  %v494 = vld [vmem:[%s484 + $0x48] sm:$0xff]
  %v495 = vld [vmem:[%s484 + $0x50] sm:$0xff]
  %v496 = vld [vmem:[%s484 + $0x58] sm:$0xff]
  %v497 = vld [vmem:[%s484 + $0x60] sm:$0xff]
  %v498 = vld [vmem:[%s484 + $0x68] sm:$0xff]
  %v499 = vld [vmem:[%s484 + $0x70] sm:$0xff]
  %v500 = vld [vmem:[%s484 + $0x78] sm:$0xff]
  %501 = vmatpush.msra.mxu0 %v500
  %502 = vmatpush.msra.mxu0 %v499
  %503 = vmatpush.msra.mxu0 %v498
  %504 = vmatpush.msra.mxu0 %v497
  %505 = vmatpush.msra.mxu0 %v496
  %506 = vmatpush.msra.mxu0 %v495
  %507 = vmatpush.msra.mxu0 %v494
  %508 = vmatpush.msra.mxu0 %v493
  %509 = vmatpush.msra.mxu0 %v492
  %510 = vmatpush.msra.mxu0 %v491
  %511 = vmatpush.msra.mxu0 %v490
  %512 = vmatpush.msra.mxu0 %v489
  %513 = vmatpush.msra.mxu0 %v488
  %514 = vmatpush.msra.mxu0 %v487
  %515 = vmatpush.msra.mxu0 %v486
  %516 = vmatpush.msra.mxu0 %v485
  %517 = vmatmul.f32.gmra.mxu0 %v373
  %v518 = vpop.f32.mrf.mxu0
  %v519 = vadd.f32 0.0, %v518
  %520 = vmatmul.f32.gmra.mxu0 %v374
  %v521 = vpop.f32.mrf.mxu0
  %v522 = vadd.f32 0.0, %v521
  %523 = vdwg.mxu0
  %v524 = vpack.c.bf16 %v522, %v519
  %525 = vmatpush.bf16.msra.mxu0 0
  %526 = vmatpush.bf16.msra.mxu0 0
  %527 = vmatpush.bf16.msra.mxu0 0
  %528 = vmatpush.bf16.msra.mxu0 0
  %529 = vmatpush.bf16.msra.mxu0 0
  %530 = vmatpush.bf16.msra.mxu0 0
  %531 = vmatpush.bf16.msra.mxu0 0
  %532 = vmatpush.bf16.msra.mxu0 %v524
  %533 = vmatmul.bf16.gmra.mxu0 %v175
  %v534 = vpop.f32.mrf.mxu0
  %v535 = vadd.f32 0.0, %v534
  %v536 = vpop.f32.mrf.mxu0
  %v537 = vadd.f32 0.0, %v536
  %538 = vdwg.mxu0
  %v539 = vadd.f32 %v480, %v535
  %v540 = vadd.f32 %v482, %v537
  %v541 = vld [vmem:[%s7] sm:$0x1]
  %v543 = vperm.slane %v541, 0
  %v545 = vadd.f32 %v539, %v543
  %v546 = vadd.f32 %v540, %v543
  %547 = vst [vmem:[%s8] sm:$0xff] %v545
  %548 = vst [vmem:[%s8 + $0x8] sm:$0xff] %v546
  // Predicated region
  $region34: #{rgcn3conv_forward.1} parent=0 // pred_check
    _
  $region35: #{rgcn3conv_forward.1} parent=0 // pred_check_branch
    %550 = sbr.rel (0) target = $region37
  $region36: #{rgcn3conv_forward.1} parent=0 // pred_region
    _
  $region37: #{rgcn3conv_forward.1} parent=0 // pred_fallthru
    _
  // Predicated region
  $region38: #{rgcn3conv_forward.1} parent=0 // pred_check
    _
  $region39: #{rgcn3conv_forward.1} parent=0 // pred_check_branch
    %552 = sbr.rel (0) target = $region41
  $region40: #{rgcn3conv_forward.1} parent=0 // pred_region
    _
  $region41: #{rgcn3conv_forward.1} parent=0 // pred_fallthru
    _

</llo_original>
